<compile_context>
chip_gen: v6e
topology: v6e:2x2x1
jax: 0.10.0
libtpu: 0.0.40
codegen_flags: <defaults>
</compile_context>

<pallas_src>
import functools

import jax
import jax.numpy as jnp
from jax import lax
from jax.experimental import pallas as pl
from jax.experimental.pallas import tpu as pltpu


def _round_up(v, m):
    return ((v + m - 1) // m) * m


def _vmem_capacity_bytes():
    """Physical VMEM of the local TPU (64 MiB v7x, 128 MiB v5e/v6e)."""
    try:
        info = pltpu.get_tpu_info()
        cap = getattr(info, "vmem_capacity_bytes", None)
        if cap:
            return int(cap)
    except Exception:
        pass
    return 64 << 20  # conservative fallback


def _cam_kernel(c_real, bb, cache_x, energy_dtype, attn_dtype, approx_recip,
                gamma_ref, x_ref, o_ref, acc_ref, e_ref, scale_ref, *cache_scr):
    """Two-phase CAM body; grid = (batch_group, phase, n_tile)."""
    xcache_ref = cache_scr[0] if cache_x else None
    p = pl.program_id(1)            # phase: 0 = energy/softmax, 1 = output
    j = pl.program_id(2)            # N-tile index
    nt = pl.num_programs(2)
    cp = x_ref.shape[1]

    # ---- phase 0, first tile: zero the energy accumulators -----------------
    @pl.when(jnp.logical_and(p == 0, j == 0))
    def _():
        acc_ref[...] = jnp.zeros_like(acc_ref)

    # ---- phase 0: energy += X_tile @ X_tile^T per packed batch -------------
    @pl.when(p == 0)
    def _():
        x_tile = x_ref[...]                              # (bb, cp, tn)
        if cache_x:
            xcache_ref[j] = x_tile                       # keep X resident in VMEM
        for bi in range(bb):
            xb = x_tile[bi].astype(energy_dtype)
            # Contract the last axis of both operands: X @ X^T without a
            # transposed VMEM copy of X.
            acc_ref[bi] += lax.dot_general(
                xb, xb,
                dimension_numbers=(((1,), (1,)), ((), ())),
                preferred_element_type=jnp.float32)

    # ---- phase 0, last tile: softmax prep -----------------------------------
    @pl.when(jnp.logical_and(p == 0, j == nt - 1))
    def _():
        if c_real != cp:
            # Columns >= c_real come from zero-padded channels: exclude them
            # from the row reduction and zero their weights.
            col = lax.broadcasted_iota(jnp.int32, (cp, cp), 1)
            valid = col < c_real
        for bi in range(bb):
            energy = acc_ref[bi]                          # (cp, cp) f32
            # softmax(rowmax(E) - E) == exp(rowmin(E) - E) / rowsum
            # (softmax is shift invariant -> one row reduction instead of two).
            if c_real != cp:
                emin = jnp.min(jnp.where(valid, energy, jnp.inf),
                               axis=-1, keepdims=True)
                e = jnp.exp(jnp.where(valid, emin - energy, -jnp.inf))
            else:
                emin = jnp.min(energy, axis=-1, keepdims=True)
                e = jnp.exp(emin - energy)
            rowsum = jnp.sum(e, axis=-1, keepdims=True)   # >= 1, never zero
            # Fold gamma and the softmax denominator into one per-row scale.
            scale_ref[bi] = gamma_ref[0] * pl.reciprocal(rowsum,
                                                         approx=approx_recip)
            e_ref[bi] = e.astype(e_ref.dtype)             # un-normalized weights

    # ---- phase 1: out_tile = (E @ X_tile) * scale + X_tile -------------------
    @pl.when(p == 1)
    def _():
        if cache_x:
            x_all = xcache_ref[j]                         # VMEM cache, no HBM read
        else:
            x_all = x_ref[...]                            # streamed again from HBM
        for bi in range(bb):
            x_orig = x_all[bi]                            # (cp, tn)
            out = jnp.dot(e_ref[bi], x_orig.astype(attn_dtype),
                          preferred_element_type=jnp.float32)
            o_ref[bi] = (out * scale_ref[bi]
                         + x_orig.astype(jnp.float32)).astype(o_ref.dtype)


def cam_module(x, gamma, *, matmul_dtype=None, attn_matmul_dtype=None,
               n_tile=1024, cache_x=None):
    """Channel attention: gamma * (softmax(rowmax(XX^T)-XX^T) @ X) + x.

    x: (B, C, H, W); gamma: scalar or (1,).  Returns (B, C, H, W) in x.dtype.
    matmul_dtype      : operand dtype of the energy matmul (None -> bf16 for
                        16-bit inputs, f32 otherwise; energies are exponentiated
                        so they stay high precision for f32 inputs).
    attn_matmul_dtype : operand dtype of the attention (E @ X) matmul
                        (None -> bf16: weights are in (0,1], error is linear).
    cache_x           : None = auto (keep X resident in VMEM when it fits),
                        True/False to force.
    """
    B, C, H, W = x.shape
    N = H * W
    x_dtype = jnp.dtype(x.dtype)
    x_item = x_dtype.itemsize

    # ---- matmul operand dtypes ---------------------------------------------
    if matmul_dtype is not None:
        energy_dtype = jnp.dtype(matmul_dtype)
    else:
        energy_dtype = (jnp.dtype(jnp.bfloat16) if x_item <= 2
                        else jnp.dtype(jnp.float32))
    if attn_matmul_dtype is not None:
        attn_dtype = jnp.dtype(attn_matmul_dtype)
    else:
        attn_dtype = jnp.dtype(jnp.bfloat16)
    attn_item = attn_dtype.itemsize
    approx_recip = attn_dtype == jnp.dtype(jnp.bfloat16)

    # ---- layout padding ------------------------------------------------------
    min_item = min(x_item, energy_dtype.itemsize, attn_item)
    c_mult = max(8, 32 // min_item)
    cp = _round_up(C, c_mult)

    n_lane = _round_up(N, 128)
    tn_max = max(128, _round_up(n_tile, 128))
    if n_lane <= tn_max:
        tn, n_tiles = n_lane, 1
    else:
        n_tiles = -(-n_lane // tn_max)
        tn = _round_up(-(-n_lane // n_tiles), 128)   # minimize N padding
    npad = tn * n_tiles
    assert npad % tn == 0 and npad >= N

    # ---- per-generation VMEM budgeting --------------------------------------
    vmem_cap = _vmem_capacity_bytes()
    vmem_ceiling = int(vmem_cap * 0.78)   # ~100 MiB on 128 MiB parts, ~50 MiB v7x
    cache_budget = int(vmem_cap * 0.35)   # gate for keeping X resident

    def vmem_est(bb_, cache_):
        est = (4 * bb_ * cp * tn * x_item            # in/out tiles, double-buffered
               + bb_ * cp * cp * (4 + attn_item)     # energy acc + E scratch
               + bb_ * cp * 128 * 4                  # per-row scale (lane padded)
               + bb_ * cp * tn * 24                  # f32 body temporaries
               + (2 << 20))                          # slack
        if cache_:
            est += n_tiles * bb_ * cp * tn * x_item  # resident X cache
        return est

    # Small-C batch packing: amortize DMA / grid-step overhead / MXU underfill.
    bb = 1
    if cp <= 128 and B > 1:
        bb = int(min(B, max(1, 256 // cp), 8))
        while bb > 1 and vmem_est(bb, False) > cache_budget:
            bb -= 1

    if cache_x is None:
        cache_x = vmem_est(bb, True) <= cache_budget
    cache_x = bool(cache_x)

    vmem_limit = int(min(max(int(vmem_est(bb, cache_x) * 1.25), 32 << 20),
                         vmem_ceiling))

    # ---- pad input to (Bp, cp, npad) ----------------------------------------
    Bp = _round_up(B, bb)
    x_flat = x.reshape(B, C, N)
    if (Bp, cp, npad) != (B, C, N):
        # Zero N/B padding contributes nothing to the energy and is sliced away;
        # zero C padding is masked inside the kernel.
        x_flat = jnp.pad(x_flat, ((0, Bp - B), (0, cp - C), (0, npad - N)))

    gamma_arr = jnp.asarray(gamma, jnp.float32).reshape((1,))

    if cache_x:
        # Phase 1 parks the x window on the last phase-0 block -> X is DMA'd
        # from HBM exactly once per batch group; phase 1 reads the VMEM cache.
        x_map = lambda b, p, j: (b, 0, j + p * (n_tiles - 1 - j))
    else:
        x_map = lambda b, p, j: (b, 0, j)

    scratch = [pltpu.VMEM((bb, cp, cp), jnp.float32),   # energy accumulators
               pltpu.VMEM((bb, cp, cp), attn_dtype),    # un-normalized softmax E
               pltpu.VMEM((bb, cp, 1), jnp.float32)]    # gamma / rowsum
    if cache_x:
        scratch.append(pltpu.VMEM((n_tiles, bb, cp, tn), x_dtype))

    kernel = functools.partial(_cam_kernel, C, bb, cache_x,
                               energy_dtype, attn_dtype, approx_recip)

    out_flat = pl.pallas_call(
        kernel,
        out_shape=jax.ShapeDtypeStruct((Bp, cp, npad), x.dtype),
        grid_spec=pltpu.PrefetchScalarGridSpec(
            num_scalar_prefetch=0,
            grid=(Bp // bb, 2, n_tiles),                 # (batch group, phase, N-tile)
            in_specs=[
                pl.BlockSpec(memory_space=pltpu.MemorySpace.SMEM),   # gamma
                pl.BlockSpec((bb, cp, tn), x_map),                   # x tiles
            ],
            # Phase 0 never writes: keep its output window on tile 0 so no
            # garbage write-back happens before phase 1 fills each block.
            out_specs=pl.BlockSpec((bb, cp, tn), lambda b, p, j: (b, 0, j * p)),
            scratch_shapes=scratch,
        ),
        compiler_params=pltpu.CompilerParams(
            dimension_semantics=("parallel", "arbitrary", "arbitrary"),
            vmem_limit_bytes=vmem_limit,
        ),
        cost_estimate=pl.CostEstimate(
            flops=int(4 * Bp * cp * cp * npad),          # energy + output matmuls
            transcendentals=int(Bp * cp * cp),           # exp
            bytes_accessed=int((2 if cache_x else 3) * Bp * cp * npad * x_item),
        ),
    )(gamma_arr, x_flat)

    if (Bp, cp, npad) != (B, C, N):
        out_flat = out_flat[:B, :C, :N]
    return out_flat.reshape(B, C, H, W)


def _cam_reference(x, gamma):
    """Pure-JAX reference mirroring the PyTorch forward (f32, high precision)."""
    B, C, H, W = x.shape
    hi = jax.lax.Precision.HIGHEST
    xf = x.reshape(B, C, H * W).astype(jnp.float32)
    energy = jnp.einsum("bcn,bdn->bcd", xf, xf, precision=hi)
    energy_new = jnp.max(energy, axis=-1, keepdims=True) - energy
    attn = jax.nn.softmax(energy_new, axis=-1)
    out = jnp.einsum("bcd,bdn->bcn", attn, xf, precision=hi).reshape(B, C, H, W)
    g = jnp.asarray(gamma, jnp.float32).reshape(-1)[0]
    return g * out + x.astype(jnp.float32)


if __name__ == "__main__":
    key = jax.random.PRNGKey(0)
    B, C, H, W = 2, 4, 16, 16
    # Modest scale keeps the channel-energy exponents O(1) so the softmax is
    # non-degenerate and the tolerances are robust to MXU precision details.
    x = 0.05 * jax.random.normal(key, (B, C, H, W), dtype=jnp.float32)

    # Parameter init per the module __init__: gamma = zeros(1) -> out == x.
    gamma0 = jnp.zeros((1,), dtype=jnp.float32)
    out0 = jax.block_until_ready(cam_module(x, gamma0))
    assert out0.shape == (B, C, H, W)
    assert jnp.allclose(out0, _cam_reference(x, gamma0), atol=1e-6, rtol=1e-6)

    gamma1 = jnp.array([0.5], dtype=jnp.float32)
    ref1 = _cam_reference(x, gamma1)

    # Default fast path: f32 energy, bf16-operand attention matmul, X cache.
    out1 = jax.block_until_ready(cam_module(x, gamma1))
    assert jnp.allclose(out1, ref1, atol=1e-2, rtol=1e-2)

    # Precise path: f32 operands for both matmuls, exact reciprocal.
    out1p = jax.block_until_ready(
        cam_module(x, gamma1, attn_matmul_dtype=jnp.float32))
    assert jnp.allclose(out1p, ref1, atol=5e-3, rtol=5e-3)

    # bf16 inputs: bf16-operand energy (exact products, f32 accumulation).
    x_bf = x.astype(jnp.bfloat16)
    out_bf = jax.block_until_ready(cam_module(x_bf, gamma1))
    assert out_bf.dtype == jnp.bfloat16
    ref_bf = _cam_reference(x_bf.astype(jnp.float32), gamma1)
    assert jnp.allclose(out_bf.astype(jnp.float32), ref_bf, atol=2e-2, rtol=2e-2)

    # Multi-tile N with the VMEM-resident X cache + batch packing (C=8 -> bb=2).
    B2, C2, H2, W2 = 2, 8, 32, 40
    x2 = 0.05 * jax.random.normal(jax.random.PRNGKey(0), (B2, C2, H2, W2),
                                  dtype=jnp.float32)
    ref2 = _cam_reference(x2, gamma1)
    out2 = jax.block_until_ready(cam_module(x2, gamma1, n_tile=512))
    assert jnp.allclose(out2, ref2, atol=1e-2, rtol=1e-2)

    # Same shape, forcing the streaming fallback (no X cache): exercises the
    # phase-0 -> phase-1 boundary with re-fetched tiles and N padding.
    out3 = jax.block_until_ready(
        cam_module(x2, gamma1, n_tile=512, cache_x=False))
    assert jnp.allclose(out3, ref2, atol=1e-2, rtol=1e-2)

    print("KERNEL_OK")
</pallas_src>

<mosaic_0001>
module attributes {stable_mosaic.version = 11 : i64} {
  func.func @_cam_kernel(%arg0: i32, %arg1: i32, %arg2: i32, %arg3: memref<1xf32, #tpu.memory_space<smem>>, %arg4: memref<2x16x256xf32, #tpu.memory_space<vmem>>, %arg5: memref<2x16x256xf32, #tpu.memory_space<vmem>>, %arg6: memref<2x16x16xf32, #tpu.memory_space<vmem>>, %arg7: memref<2x16x16xbf16, #tpu.memory_space<vmem>>, %arg8: memref<2x16x1xf32, #tpu.memory_space<vmem>>, %arg9: memref<1x2x16x256xf32, #tpu.memory_space<vmem>>) attributes {dimension_semantics = [#tpu.dimension_semantics<parallel>, #tpu.dimension_semantics<arbitrary>, #tpu.dimension_semantics<arbitrary>], iteration_bounds = array<i64: 1, 2, 1>, scalar_prefetch = 0 : i64, scratch_operands = 4 : i64, tpu.core_type = #tpu.core_type<tc>, window_params = [{transform_indices = @transform_0, window_bounds = array<i64: 1>}, {transform_indices = @transform_1, window_bounds = array<i64: 2, 16, 256>}, {transform_indices = @transform_2, window_bounds = array<i64: 2, 16, 256>}]} {
    %c0_i32 = arith.constant 0 : i32
    %0 = arith.cmpi eq, %arg1, %c0_i32 : i32
    %c0_i32_0 = arith.constant 0 : i32
    %1 = arith.cmpi eq, %arg2, %c0_i32_0 : i32
    %2 = arith.andi %0, %1 : i1
    %3 = arith.extui %2 : i1 to i32
    %c0_i32_1 = arith.constant 0 : i32
    %4 = arith.cmpi ne, %3, %c0_i32_1 : i32
    scf.if %4 {
      %cst = arith.constant 0.000000e+00 : f32
      %16 = vector.broadcast %cst : f32 to vector<2x16x16xf32>
      %c0 = arith.constant 0 : index
      %c0_8 = arith.constant 0 : index
      %c0_9 = arith.constant 0 : index
      %17 = vector.load %arg6[%c0, %c0_8, %c0_9] : memref<2x16x16xf32, #tpu.memory_space<vmem>>, vector<2x16x16xf32>
      tpu.vector_store %arg6[%c0, %c0_8, %c0_9], %16 {strides = array<i32>} : memref<2x16x16xf32, #tpu.memory_space<vmem>>, vector<2x16x16xf32>,
    } else {
    }
    %c0_i32_2 = arith.constant 0 : i32
    %5 = arith.cmpi eq, %arg1, %c0_i32_2 : i32
    %6 = arith.extui %5 : i1 to i32
    %c0_i32_3 = arith.constant 0 : i32
    %7 = arith.cmpi ne, %6, %c0_i32_3 : i32
    scf.if %7 {
      %c0 = arith.constant 0 : index
      %c0_8 = arith.constant 0 : index
      %c0_9 = arith.constant 0 : index
      %16 = vector.load %arg4[%c0, %c0_8, %c0_9] : memref<2x16x256xf32, #tpu.memory_space<vmem>>, vector<2x16x256xf32>
      %17 = arith.index_cast %arg2 : i32 to index
      %c0_10 = arith.constant 0 : index
      %c0_11 = arith.constant 0 : index
      %c0_12 = arith.constant 0 : index
      %18 = vector.load %arg9[%17, %c0_10, %c0_11, %c0_12] : memref<1x2x16x256xf32, #tpu.memory_space<vmem>>, vector<1x2x16x256xf32>
      %19 = vector.shape_cast %18 : vector<1x2x16x256xf32> to vector<2x16x256xf32>
      %20 = vector.shape_cast %16 : vector<2x16x256xf32> to vector<1x2x16x256xf32>
      tpu.vector_store %arg9[%17, %c0_10, %c0_11, %c0_12], %20 {strides = array<i32>} : memref<1x2x16x256xf32, #tpu.memory_space<vmem>>, vector<1x2x16x256xf32>,
      %21 = vector.extract_strided_slice %16 {offsets = [0, 0, 0], sizes = [1, 16, 256], strides = [1, 1, 1]} : vector<2x16x256xf32> to vector<1x16x256xf32>
      %22 = vector.shape_cast %21 : vector<1x16x256xf32> to vector<16x256xf32>
      %c0_13 = arith.constant 0 : index
      %c0_14 = arith.constant 0 : index
      %c0_15 = arith.constant 0 : index
      %23 = vector.load %arg6[%c0_13, %c0_14, %c0_15] : memref<2x16x16xf32, #tpu.memory_space<vmem>>, vector<1x16x16xf32>
      %24 = vector.shape_cast %23 : vector<1x16x16xf32> to vector<16x16xf32>
      %cst = arith.constant dense<0.000000e+00> : vector<16x16xf32>
      %25 = tpu.matmul %22, %22, %cst {dimension_numbers = #tpu.dot_dimension_numbers<[1], [1], [0], [0], [0, 0, 1, 0], [], []>} : vector<16x256xf32>, vector<16x256xf32>, vector<16x16xf32> -> vector<16x16xf32>
      %26 = arith.addf %24, %25 : vector<16x16xf32>
      %c0_16 = arith.constant 0 : index
      %c0_17 = arith.constant 0 : index
      %c0_18 = arith.constant 0 : index
      %27 = vector.load %arg6[%c0_16, %c0_17, %c0_18] : memref<2x16x16xf32, #tpu.memory_space<vmem>>, vector<1x16x16xf32>
      %28 = vector.shape_cast %27 : vector<1x16x16xf32> to vector<16x16xf32>
      %29 = vector.shape_cast %26 : vector<16x16xf32> to vector<1x16x16xf32>
      tpu.vector_store %arg6[%c0_16, %c0_17, %c0_18], %29 {strides = array<i32>} : memref<2x16x16xf32, #tpu.memory_space<vmem>>, vector<1x16x16xf32>,
      %30 = vector.extract_strided_slice %16 {offsets = [1, 0, 0], sizes = [1, 16, 256], strides = [1, 1, 1]} : vector<2x16x256xf32> to vector<1x16x256xf32>
      %31 = vector.shape_cast %30 : vector<1x16x256xf32> to vector<16x256xf32>
      %c1 = arith.constant 1 : index
      %c0_19 = arith.constant 0 : index
      %c0_20 = arith.constant 0 : index
      %32 = vector.load %arg6[%c1, %c0_19, %c0_20] : memref<2x16x16xf32, #tpu.memory_space<vmem>>, vector<1x16x16xf32>
      %33 = vector.shape_cast %32 : vector<1x16x16xf32> to vector<16x16xf32>
      %cst_21 = arith.constant dense<0.000000e+00> : vector<16x16xf32>
      %34 = tpu.matmul %31, %31, %cst_21 {dimension_numbers = #tpu.dot_dimension_numbers<[1], [1], [0], [0], [0, 0, 1, 0], [], []>} : vector<16x256xf32>, vector<16x256xf32>, vector<16x16xf32> -> vector<16x16xf32>
      %35 = arith.addf %33, %34 : vector<16x16xf32>
      %c1_22 = arith.constant 1 : index
      %c0_23 = arith.constant 0 : index
      %c0_24 = arith.constant 0 : index
      %36 = vector.load %arg6[%c1_22, %c0_23, %c0_24] : memref<2x16x16xf32, #tpu.memory_space<vmem>>, vector<1x16x16xf32>
      %37 = vector.shape_cast %36 : vector<1x16x16xf32> to vector<16x16xf32>
      %38 = vector.shape_cast %35 : vector<16x16xf32> to vector<1x16x16xf32>
      tpu.vector_store %arg6[%c1_22, %c0_23, %c0_24], %38 {strides = array<i32>} : memref<2x16x16xf32, #tpu.memory_space<vmem>>, vector<1x16x16xf32>,
    } else {
    }
    %c0_i32_4 = arith.constant 0 : i32
    %8 = arith.cmpi eq, %arg1, %c0_i32_4 : i32
    %c0_i32_5 = arith.constant 0 : i32
    %9 = arith.cmpi eq, %arg2, %c0_i32_5 : i32
    %10 = arith.andi %8, %9 : i1
    %11 = arith.extui %10 : i1 to i32
    %c0_i32_6 = arith.constant 0 : i32
    %12 = arith.cmpi ne, %11, %c0_i32_6 : i32
    scf.if %12 {
      %16 = tpu.iota {dimensions = array<i32: 1>} : vector<16x16xi32>
      %c4_i32 = arith.constant 4 : i32
      %17 = vector.broadcast %c4_i32 : i32 to vector<16x16xi32>
      %18 = arith.cmpi slt, %16, %17 : vector<16x16xi32>
      %c0 = arith.constant 0 : index
      %c0_8 = arith.constant 0 : index
      %c0_9 = arith.constant 0 : index
      %19 = vector.load %arg6[%c0, %c0_8, %c0_9] : memref<2x16x16xf32, #tpu.memory_space<vmem>>, vector<1x16x16xf32>
      %20 = vector.shape_cast %19 : vector<1x16x16xf32> to vector<16x16xf32>
      %cst = arith.constant 0x7F800000 : f32
      %21 = vector.broadcast %cst : f32 to vector<16x16xf32>
      %22 = arith.select %18, %20, %21 : vector<16x16xi1>, vector<16x16xf32>
      %cst_10 = arith.constant dense<0x7F800000> : vector<16xf32>
      %23 = vector.multi_reduction <minimumf>, %22, %cst_10 [1] : vector<16x16xf32> to vector<16xf32>
      %24 = vector.shape_cast %23 : vector<16xf32> to vector<16x1xf32>
      %25 = vector.broadcast %24 : vector<16x1xf32> to vector<16x16xf32>
      %26 = arith.subf %25, %20 : vector<16x16xf32>
      %cst_11 = arith.constant 0xFF800000 : f32
      %27 = vector.broadcast %cst_11 : f32 to vector<16x16xf32>
      %28 = arith.select %18, %26, %27 : vector<16x16xi1>, vector<16x16xf32>
      %29 = math.exp %28 : vector<16x16xf32>
      %cst_12 = arith.constant dense<0.000000e+00> : vector<16xf32>
      %30 = vector.multi_reduction <add>, %29, %cst_12 [1] : vector<16x16xf32> to vector<16xf32>
      %31 = vector.shape_cast %30 : vector<16xf32> to vector<16x1xf32>
      %c0_13 = arith.constant 0 : index
      %32 = memref.load %arg3[%c0_13] : memref<1xf32, #tpu.memory_space<smem>>
      %33 = tpu.reciprocal %31 {approx = true} : vector<16x1xf32> -> vector<16x1xf32>
      %34 = vector.broadcast %32 : f32 to vector<16x1xf32>
      %35 = arith.mulf %34, %33 : vector<16x1xf32>
      %c0_14 = arith.constant 0 : index
      %c0_15 = arith.constant 0 : index
      %c0_16 = arith.constant 0 : index
      %36 = vector.load %arg8[%c0_14, %c0_15, %c0_16] : memref<2x16x1xf32, #tpu.memory_space<vmem>>, vector<1x16x1xf32>
      %37 = vector.shape_cast %36 : vector<1x16x1xf32> to vector<16x1xf32>
      %38 = vector.shape_cast %35 : vector<16x1xf32> to vector<1x16x1xf32>
      tpu.vector_store %arg8[%c0_14, %c0_15, %c0_16], %38 {strides = array<i32>} : memref<2x16x1xf32, #tpu.memory_space<vmem>>, vector<1x16x1xf32>,
      %39 = arith.truncf %29 : vector<16x16xf32> to vector<16x16xbf16>
      %c0_17 = arith.constant 0 : index
      %c0_18 = arith.constant 0 : index
      %c0_19 = arith.constant 0 : index
      %40 = vector.load %arg7[%c0_17, %c0_18, %c0_19] : memref<2x16x16xbf16, #tpu.memory_space<vmem>>, vector<1x16x16xbf16>
      %41 = vector.shape_cast %40 : vector<1x16x16xbf16> to vector<16x16xbf16>
      %42 = vector.shape_cast %39 : vector<16x16xbf16> to vector<1x16x16xbf16>
      tpu.vector_store %arg7[%c0_17, %c0_18, %c0_19], %42 {strides = array<i32>} : memref<2x16x16xbf16, #tpu.memory_space<vmem>>, vector<1x16x16xbf16>,
      %c1 = arith.constant 1 : index
      %c0_20 = arith.constant 0 : index
      %c0_21 = arith.constant 0 : index
      %43 = vector.load %arg6[%c1, %c0_20, %c0_21] : memref<2x16x16xf32, #tpu.memory_space<vmem>>, vector<1x16x16xf32>
      %44 = vector.shape_cast %43 : vector<1x16x16xf32> to vector<16x16xf32>
      %cst_22 = arith.constant 0x7F800000 : f32
      %45 = vector.broadcast %cst_22 : f32 to vector<16x16xf32>
      %46 = arith.select %18, %44, %45 : vector<16x16xi1>, vector<16x16xf32>
      %cst_23 = arith.constant dense<0x7F800000> : vector<16xf32>
      %47 = vector.multi_reduction <minimumf>, %46, %cst_23 [1] : vector<16x16xf32> to vector<16xf32>
      %48 = vector.shape_cast %47 : vector<16xf32> to vector<16x1xf32>
      %49 = vector.broadcast %48 : vector<16x1xf32> to vector<16x16xf32>
      %50 = arith.subf %49, %44 : vector<16x16xf32>
      %cst_24 = arith.constant 0xFF800000 : f32
      %51 = vector.broadcast %cst_24 : f32 to vector<16x16xf32>
      %52 = arith.select %18, %50, %51 : vector<16x16xi1>, vector<16x16xf32>
      %53 = math.exp %52 : vector<16x16xf32>
      %cst_25 = arith.constant dense<0.000000e+00> : vector<16xf32>
      %54 = vector.multi_reduction <add>, %53, %cst_25 [1] : vector<16x16xf32> to vector<16xf32>
      %55 = vector.shape_cast %54 : vector<16xf32> to vector<16x1xf32>
      %c0_26 = arith.constant 0 : index
      %56 = memref.load %arg3[%c0_26] : memref<1xf32, #tpu.memory_space<smem>>
      %57 = tpu.reciprocal %55 {approx = true} : vector<16x1xf32> -> vector<16x1xf32>
      %58 = vector.broadcast %56 : f32 to vector<16x1xf32>
      %59 = arith.mulf %58, %57 : vector<16x1xf32>
      %c1_27 = arith.constant 1 : index
      %c0_28 = arith.constant 0 : index
      %c0_29 = arith.constant 0 : index
      %60 = vector.load %arg8[%c1_27, %c0_28, %c0_29] : memref<2x16x1xf32, #tpu.memory_space<vmem>>, vector<1x16x1xf32>
      %61 = vector.shape_cast %60 : vector<1x16x1xf32> to vector<16x1xf32>
      %62 = vector.shape_cast %59 : vector<16x1xf32> to vector<1x16x1xf32>
      tpu.vector_store %arg8[%c1_27, %c0_28, %c0_29], %62 {strides = array<i32>} : memref<2x16x1xf32, #tpu.memory_space<vmem>>, vector<1x16x1xf32>,
      %63 = arith.truncf %53 : vector<16x16xf32> to vector<16x16xbf16>
      %c1_30 = arith.constant 1 : index
      %c0_31 = arith.constant 0 : index
      %c0_32 = arith.constant 0 : index
      %64 = vector.load %arg7[%c1_30, %c0_31, %c0_32] : memref<2x16x16xbf16, #tpu.memory_space<vmem>>, vector<1x16x16xbf16>
      %65 = vector.shape_cast %64 : vector<1x16x16xbf16> to vector<16x16xbf16>
      %66 = vector.shape_cast %63 : vector<16x16xbf16> to vector<1x16x16xbf16>
      tpu.vector_store %arg7[%c1_30, %c0_31, %c0_32], %66 {strides = array<i32>} : memref<2x16x16xbf16, #tpu.memory_space<vmem>>, vector<1x16x16xbf16>,
    } else {
    }
    %c1_i32 = arith.constant 1 : i32
    %13 = arith.cmpi eq, %arg1, %c1_i32 : i32
    %14 = arith.extui %13 : i1 to i32
    %c0_i32_7 = arith.constant 0 : i32
    %15 = arith.cmpi ne, %14, %c0_i32_7 : i32
    scf.if %15 {
      %16 = arith.index_cast %arg2 : i32 to index
      %c0 = arith.constant 0 : index
      %c0_8 = arith.constant 0 : index
      %c0_9 = arith.constant 0 : index
      %17 = vector.load %arg9[%16, %c0, %c0_8, %c0_9] : memref<1x2x16x256xf32, #tpu.memory_space<vmem>>, vector<1x2x16x256xf32>
      %18 = vector.shape_cast %17 : vector<1x2x16x256xf32> to vector<2x16x256xf32>
      %19 = vector.extract_strided_slice %18 {offsets = [0, 0, 0], sizes = [1, 16, 256], strides = [1, 1, 1]} : vector<2x16x256xf32> to vector<1x16x256xf32>
      %20 = vector.shape_cast %19 : vector<1x16x256xf32> to vector<16x256xf32>
      %c0_10 = arith.constant 0 : index
      %c0_11 = arith.constant 0 : index
      %c0_12 = arith.constant 0 : index
      %21 = vector.load %arg7[%c0_10, %c0_11, %c0_12] : memref<2x16x16xbf16, #tpu.memory_space<vmem>>, vector<1x16x16xbf16>
      %22 = vector.shape_cast %21 : vector<1x16x16xbf16> to vector<16x16xbf16>
      %23 = arith.truncf %20 : vector<16x256xf32> to vector<16x256xbf16>
      %cst = arith.constant dense<0.000000e+00> : vector<16x256xf32>
      %24 = tpu.matmul %22, %23, %cst {dimension_numbers = #tpu.dot_dimension_numbers<[1], [0], [0], [1], [0, 0, 1, 1], [], []>} : vector<16x16xbf16>, vector<16x256xbf16>, vector<16x256xf32> -> vector<16x256xf32>
      %c0_13 = arith.constant 0 : index
      %c0_14 = arith.constant 0 : index
      %c0_15 = arith.constant 0 : index
      %25 = vector.load %arg8[%c0_13, %c0_14, %c0_15] : memref<2x16x1xf32, #tpu.memory_space<vmem>>, vector<1x16x1xf32>
      %26 = vector.shape_cast %25 : vector<1x16x1xf32> to vector<16x1xf32>
      %27 = vector.broadcast %26 : vector<16x1xf32> to vector<16x256xf32>
      %28 = arith.mulf %24, %27 : vector<16x256xf32>
      %29 = arith.addf %28, %20 : vector<16x256xf32>
      %c0_16 = arith.constant 0 : index
      %c0_17 = arith.constant 0 : index
      %c0_18 = arith.constant 0 : index
      %30 = vector.load %arg5[%c0_16, %c0_17, %c0_18] : memref<2x16x256xf32, #tpu.memory_space<vmem>>, vector<1x16x256xf32>
      %31 = vector.shape_cast %30 : vector<1x16x256xf32> to vector<16x256xf32>
      %32 = vector.shape_cast %29 : vector<16x256xf32> to vector<1x16x256xf32>
      tpu.vector_store %arg5[%c0_16, %c0_17, %c0_18], %32 {strides = array<i32>} : memref<2x16x256xf32, #tpu.memory_space<vmem>>, vector<1x16x256xf32>,
      %33 = vector.extract_strided_slice %18 {offsets = [1, 0, 0], sizes = [1, 16, 256], strides = [1, 1, 1]} : vector<2x16x256xf32> to vector<1x16x256xf32>
      %34 = vector.shape_cast %33 : vector<1x16x256xf32> to vector<16x256xf32>
      %c1 = arith.constant 1 : index
      %c0_19 = arith.constant 0 : index
      %c0_20 = arith.constant 0 : index
      %35 = vector.load %arg7[%c1, %c0_19, %c0_20] : memref<2x16x16xbf16, #tpu.memory_space<vmem>>, vector<1x16x16xbf16>
      %36 = vector.shape_cast %35 : vector<1x16x16xbf16> to vector<16x16xbf16>
      %37 = arith.truncf %34 : vector<16x256xf32> to vector<16x256xbf16>
      %cst_21 = arith.constant dense<0.000000e+00> : vector<16x256xf32>
      %38 = tpu.matmul %36, %37, %cst_21 {dimension_numbers = #tpu.dot_dimension_numbers<[1], [0], [0], [1], [0, 0, 1, 1], [], []>} : vector<16x16xbf16>, vector<16x256xbf16>, vector<16x256xf32> -> vector<16x256xf32>
      %c1_22 = arith.constant 1 : index
      %c0_23 = arith.constant 0 : index
      %c0_24 = arith.constant 0 : index
      %39 = vector.load %arg8[%c1_22, %c0_23, %c0_24] : memref<2x16x1xf32, #tpu.memory_space<vmem>>, vector<1x16x1xf32>
      %40 = vector.shape_cast %39 : vector<1x16x1xf32> to vector<16x1xf32>
      %41 = vector.broadcast %40 : vector<16x1xf32> to vector<16x256xf32>
      %42 = arith.mulf %38, %41 : vector<16x256xf32>
      %43 = arith.addf %42, %34 : vector<16x256xf32>
      %c1_25 = arith.constant 1 : index
      %c0_26 = arith.constant 0 : index
      %c0_27 = arith.constant 0 : index
      %44 = vector.load %arg5[%c1_25, %c0_26, %c0_27] : memref<2x16x256xf32, #tpu.memory_space<vmem>>, vector<1x16x256xf32>
      %45 = vector.shape_cast %44 : vector<1x16x256xf32> to vector<16x256xf32>
      %46 = vector.shape_cast %43 : vector<16x256xf32> to vector<1x16x256xf32>
      tpu.vector_store %arg5[%c1_25, %c0_26, %c0_27], %46 {strides = array<i32>} : memref<2x16x256xf32, #tpu.memory_space<vmem>>, vector<1x16x256xf32>,
    } else {
    }
    return
  }
  func.func @transform_0(%arg0: i32, %arg1: i32, %arg2: i32) -> i32 {
    %c0_i32 = arith.constant 0 : i32
    %c0_i32_0 = arith.constant 0 : i32
    return %c0_i32 : i32
  }
  func.func @transform_1(%arg0: i32, %arg1: i32, %arg2: i32) -> (i32, i32, i32) {
    %c0_i32 = arith.constant 0 : i32
    %0 = arith.subi %c0_i32, %arg2 : i32
    %1 = arith.muli %arg1, %0 : i32
    %2 = arith.addi %arg2, %1 : i32
    %c0_i32_0 = arith.constant 0 : i32
    %c0_i32_1 = arith.constant 0 : i32
    return %arg0, %c0_i32_0, %2 : i32, i32, i32
  }
  func.func @transform_2(%arg0: i32, %arg1: i32, %arg2: i32) -> (i32, i32, i32) {
    %0 = arith.muli %arg2, %arg1 : i32
    %c0_i32 = arith.constant 0 : i32
    %c0_i32_0 = arith.constant 0 : i32
    return %arg0, %c0_i32, %0 : i32, i32, i32
  }
}

</mosaic_0001>

<llo_original>
// kernel: tpu_custom_call.1
$region0: #{tpu_custom_call.1}
  #allocation0 [shape = 'u32[]', space=smem, size = 0x4, offset = 0x4, fixed_abs, tag = 'smem constant byte address 0x4 - core index']
  #allocation1 [shape = 'u32[144,128]{1,0:T(1,128)}', space=vmem, size = 0x12000, scoped, tag = 'internal scratch']
  #allocation2 [shape = 'f32[2,16,16]{2,1,0:T(8,128)}', space=vmem, size = 0x4000, scoped, tag = 'scratch operand']
  #allocation3 [shape = 'bf16[2,16,16]{2,1,0:T(8,128)(2,1)}', space=vmem, size = 0x2000, scoped, tag = 'scratch operand']
  #allocation4 [shape = 'f32[2,16,1]{2,1,0:T(8,128)}', space=vmem, size = 0x4000, scoped, tag = 'scratch operand']
  #allocation5 [shape = 'f32[1,2,16,256]{3,2,1,0:T(8,128)}', space=vmem, size = 0x8000, scoped, tag = 'scratch operand']
  #allocation6 [shape = 'f32[1]{0:T(128)S(6)}', space=smem, size = 0x200, scoped, tag = 'scoped memory for tpu_custom_call.1']
  %s0 = inlined_call_operand.<no memory space> [shape: f32[1], index: 0, kind: input, shape index: {}]
  %s1 = inlined_call_operand.hbm [shape: f32[2,16,256], index: 1, kind: input, shape index: {}]
  %s2 = inlined_call_operand.hbm [shape: f32[2,16,256], index: 2, kind: output, shape index: {}]
  %s3 = sld [smem:[#allocation0]]
  $region61: #{tpu_custom_call.1} parent=0
    _
  %s5 = ssub.s32 1, %s3
  %s6 = scalar_select 0, %s5, %s3
  %7 = sst [smem:[#allocation6]] %s0
  $region1: #{tpu_custom_call.1} parent=0
    #allocation7 [shape = 'u8[65536]{0}', space=vmem, size = 0x10000, scoped, tag = 'input window, operand 1']
    #allocation8 [shape = 's32[2]{0}', space=sflag, size = 0x8, scoped, tag = 'scoped memory for tpu_custom_call.1']
    #allocation9 [shape = 's32[2]{0}', space=sflag, size = 0x8, scoped, tag = 'scoped memory for tpu_custom_call.1']
    #allocation10 [shape = 'u8[65536]{0}', space=vmem, size = 0x10000, scoped, tag = 'output window, operand 0']
    %8 = vsyncpa [#allocation8], 0
    %s9 = scalar_lea.sflag [#allocation8], 1
    %10 = vsyncpa %s9, 0
    %11 = vsyncpa [#allocation9], 0
    %s12 = scalar_lea.sflag [#allocation9], 1
    %13 = vsyncpa %s12, 0
    loop: start=0, step=1, limit=4
    $region2: #{tpu_custom_call.1} parent=1 // loop_pre_header
      _
    $region3: #{tpu_custom_call.1} parent=1 // loop_header
      %s15 = sphi 0, %s19
      %p16 = scmp.ge.s32.totalorder %s15, 4
      %s22 = sphi 0, %s41
      %s23 = sphi 0, %s37
      %s24 = sphi 0, %s33
      %s25 = sphi 0, %s22
      %s26 = sphi 0, %s23
      %s27 = sphi 0, %s24
      %s28 = sphi 0, %s25
      %s29 = sphi 0, %s26
      %s30 = sphi 0, %s27
      %s42 = sphi 0, %s42
      %s44 = sphi 0, %s42
      %s45 = sphi 0, %s44
      %s59 = sphi 0, %s45
      %s73 = sphi 0, %s75
      %s76 = sphi 0, %s73
      %s77 = sphi 0, %s76
      %s93 = sphi 0, %s77
      %s103 = sphi 0, %s105
      %s106 = sphi 0, %s103
      %s107 = sphi 0, %s106
      %s123 = sphi 0, %s107
    $region4: #{tpu_custom_call.1} parent=1 // loop_header_branch
      %18 = sbr.rel (%p16) target = $region8
    $region5: #{tpu_custom_call.1} parent=1 // loop_body
      %s20 = ssub.s32 %s15, 1
      %s21 = ssub.s32 %s15, 2
      %s31 = sadd.s32 1, %s24
      %p32 = scmp.ge.s32.totalorder %s31, 1
      %s33 = scalar_select %p32, 0, %s31
      %s34 = sadd.s32 1, %s23
      %s35 = scalar_select %p32, %s34, %s23
      %p36 = scmp.ge.s32.totalorder %s35, 2
      %s37 = scalar_select %p36, 0, %s35
      %s38 = sadd.s32 1, %s22
      %s39 = scalar_select %p36, %s38, %s22
      %p40 = scmp.ge.s32.totalorder %s39, 1
      %s41 = scalar_select %p40, 0, %s39
      %s43 = sadd.s32 %s42, 1
      %p46 = scmp.eq.s32.totalorder %s15, 1
      %p47 = scmp.ne.s32.totalorder %s42, %s44
      %p48 = scmp.eq.s32.totalorder %s15, 0
      %p49 = por %p47, %p48
      %p50 = scmp.ne.s32.totalorder %s42, %s44
      %p51 = scmp.eq.s32.totalorder %s20, 1
      %p52 = por %p50, %p51
      %p53 = scmp.ne.s32.totalorder %s44, %s45
      %p54 = scmp.eq.s32.totalorder %s20, 0
      %p55 = por %p53, %p54
      %p56 = scmp.ne.s32.totalorder %s44, %s45
      %p57 = scmp.eq.s32.totalorder %s21, 1
      %p58 = por %p56, %p57
      %p60 = scmp.ne.s32.totalorder %s45, %s59
      %p61 = scmp.eq.s32.totalorder %s21, 0
      %p62 = por %p60, %p61
      %s63 = ssub.s32 0, %s24
      %s64 = smul.u32 %s23, %s63
      %s65 = sadd.s32 %s24, %s64
      %s66 = ssub.s32 0, %s33
      %s67 = smul.u32 %s37, %s66
      %s68 = sadd.s32 %s33, %s67
      %s69 = ssub.s32 %s22, %s41
      %s70 = ssub.s32 %s65, %s68
      %s71 = sor.u32 %s69, %s70
      %p72 = scmp.eq.s32.totalorder %s71, 0
      %s74 = sadd.s32 %s73, 1
      %s75 = scalar_select %p72, %s73, %s74
      %p78 = pneg %p72
      %p79 = scmp.eq.s32.totalorder %s15, 1
      %p80 = por %p78, %p79
      %p81 = scmp.ne.s32.totalorder %s73, %s76
      %p82 = scmp.eq.s32.totalorder %s15, 0
      %p83 = por %p81, %p82
      %p84 = scmp.ne.s32.totalorder %s73, %s76
      %p85 = scmp.eq.s32.totalorder %s20, 1
      %p86 = por %p84, %p85
      %p87 = scmp.ne.s32.totalorder %s76, %s77
      %p88 = scmp.eq.s32.totalorder %s20, 0
      %p89 = por %p87, %p88
      %p90 = scmp.ne.s32.totalorder %s76, %s77
      %p91 = scmp.eq.s32.totalorder %s21, 1
      %p92 = por %p90, %p91
      %p94 = scmp.ne.s32.totalorder %s77, %s93
      %p95 = scmp.eq.s32.totalorder %s21, 0
      %p96 = por %p94, %p95
      %s97 = smul.u32 %s24, %s23
      %s98 = smul.u32 %s33, %s37
      %s99 = ssub.s32 %s22, %s41
      %s100 = ssub.s32 %s97, %s98
      %s101 = sor.u32 %s99, %s100
      %p102 = scmp.eq.s32.totalorder %s101, 0
      %s104 = sadd.s32 %s103, 1
      %s105 = scalar_select %p102, %s103, %s104
      %p108 = pneg %p102
      %p109 = scmp.eq.s32.totalorder %s15, 1
      %p110 = por %p108, %p109
      %p111 = scmp.ne.s32.totalorder %s103, %s106
      %p112 = scmp.eq.s32.totalorder %s15, 0
      %p113 = por %p111, %p112
      %p114 = scmp.ne.s32.totalorder %s103, %s106
      %p115 = scmp.eq.s32.totalorder %s20, 1
      %p116 = por %p114, %p115
      %p117 = scmp.ne.s32.totalorder %s106, %s107
      %p118 = scmp.eq.s32.totalorder %s20, 0
      %p119 = por %p117, %p118
      %p120 = scmp.ne.s32.totalorder %s106, %s107
      %p121 = scmp.eq.s32.totalorder %s21, 1
      %p122 = por %p120, %p121
      %p124 = scmp.ne.s32.totalorder %s107, %s123
      %p125 = scmp.eq.s32.totalorder %s21, 0
      %p126 = por %p124, %p125
      %p127 = scmp.le.s32.totalorder 1, %s15
      %p128 = scmp.lt.s32.totalorder %s15, 3
      %p129 = pnand %p127, %p128
      %p130 = pneg %p129
      // Predicated region
      $region9: #{tpu_custom_call.1} parent=5 // pred_check
        _
      $region10: #{tpu_custom_call.1} parent=5 // pred_check_branch
        %132 = sbr.rel (%p129) target = $region12
      $region11: #{tpu_custom_call.1} parent=5 // pred_region
        %s133 = ssub.s32 %s15, 1
        // Predicated region
        $region13: #{tpu_custom_call.1} parent=11 // pred_check
          %p134 = pneg %p55
        $region14: #{tpu_custom_call.1} parent=11 // pred_check_branch
          %136 = sbr.rel (%p134) target = $region16
        $region15: #{tpu_custom_call.1} parent=11 // pred_region
          _
        $region16: #{tpu_custom_call.1} parent=11 // pred_fallthru
          _
      $region12: #{tpu_custom_call.1} parent=5 // pred_fallthru
        _
      %p137 = scmp.lt.s32.totalorder %s15, 2
      // Predicated region
      $region17: #{tpu_custom_call.1} parent=5 // pred_check
        %p138 = pneg %p137
      $region18: #{tpu_custom_call.1} parent=5 // pred_check_branch
        %140 = sbr.rel (%p138) target = $region20
      $region19: #{tpu_custom_call.1} parent=5 // pred_region
        // Predicated region
        $region21: #{tpu_custom_call.1} parent=19 // pred_check
          %p141 = pneg %p83
        $region22: #{tpu_custom_call.1} parent=19 // pred_check_branch
          %143 = sbr.rel (%p141) target = $region24
        $region23: #{tpu_custom_call.1} parent=19 // pred_region
          %s144 = sand.u32 %s73, 1
          %s145 = scalar_lea.sflag [#allocation8], %s144
          %s146 = sand.u32 %s73, 1
          %s147 = smul.addr %s146, 64
          %s148 = scalar_lea.vmem [#allocation7], %s147
          %s149 = ssub.s32 0, %s24
          %s150 = smul.u32 %s23, %s149
          %s151 = sadd.s32 %s24, %s150
          %s152 = smul.u32 2, %s22
          %s153 = smul.u32 2, %s151
          %s155 = ssub.s32 1024, 1024
          %156 = vsyncadd %s145, %s155
          %s157 = smul.addr %s152, 4
          %s158 = sadd.s32 %s153, %s157
          %s159 = smul.addr %s158, 128
          %s160 = scalar_lea.hbm %s1, %s159
          %s161 = sshll.u32 %s148, 4
          %s162 = int_to_ptr.vmem [resolvable:$true] %s161
          %167 = dma.hbm_to_vmem [thread:$0]  %s160, 1024, %s162, %s145, 256, 256, 16
        $region24: #{tpu_custom_call.1} parent=19 // pred_fallthru
          _
      $region20: #{tpu_custom_call.1} parent=5 // pred_fallthru
        _
      %p168 = scmp.le.s32.totalorder 1, %s15
      %p169 = scmp.lt.s32.totalorder %s15, 3
      %p170 = pnand %p168, %p169
      %p171 = pneg %p170
      // Predicated region
      $region25: #{tpu_custom_call.1} parent=5 // pred_check
        _
      $region26: #{tpu_custom_call.1} parent=5 // pred_check_branch
        %173 = sbr.rel (%p170) target = $region28
      $region27: #{tpu_custom_call.1} parent=5 // pred_region
        %s174 = ssub.s32 %s15, 1
        %s175 = sand.u32 %s76, 1
        %s176 = scalar_lea.sflag [#allocation8], %s175
        %s177 = sand.u32 %s76, 1
        %s178 = smul.addr %s177, 64
        %s179 = scalar_lea.vmem [#allocation7], %s178
        // Predicated region
        $region29: #{tpu_custom_call.1} parent=27 // pred_check
          %p180 = pneg %p89
        $region30: #{tpu_custom_call.1} parent=27 // pred_check_branch
          %182 = sbr.rel (%p180) target = $region32
        $region31: #{tpu_custom_call.1} parent=27 // pred_region
          %183 = dma.done %s176, 1024
        $region32: #{tpu_custom_call.1} parent=27 // pred_fallthru
          _
        %p184 = pneg %p55
        %p185 = pneg %p52
        %s186 = sand.u32 %s76, 1
        %s187 = scalar_lea.sflag [#allocation8], %s186
        %s188 = sand.u32 %s76, 1
        %s189 = smul.addr %s188, 64
        %s190 = scalar_lea.vmem [#allocation7], %s189
        %p191 = pneg %p89
        %p192 = pneg %p86
        %p193 = pneg %p119
        %p194 = pneg %p116
        %s195 = sand.u32 %s106, 1
        %s196 = scalar_lea.sflag [#allocation9], %s195
        %s197 = sand.u32 %s106, 1
        %s198 = smul.addr %s197, 64
        %s199 = scalar_lea.vmem [#allocation10], %s198
        %s200 = ssub.s32 0, %s27
        %s201 = smul.u32 %s26, %s200
        %s202 = sadd.s32 %s27, %s201
        %s203 = smul.u32 2, %s25
        %s204 = smul.u32 2, %s202
        %s205 = smul.u32 %s27, %s26
        %s206 = smul.u32 2, %s25
        %s207 = smul.u32 2, %s205
        %p209 = scmp.eq.s32.totalorder %s26, 0
        %p210 = scmp.eq.s32.totalorder %s27, 0
        %p211 = pnand %p209, %p210
        %p212 = pneg %p211
        // Predicated region
        $region33: #{tpu_custom_call.1} parent=27 // pred_check
          _
        $region34: #{tpu_custom_call.1} parent=27 // pred_check_branch
          %214 = sbr.rel (%p211) target = $region36
        $region35: #{tpu_custom_call.1} parent=27 // pred_region
          %vm215 = vcmask 130048
          %216 = vst.msk [vmem:[#allocation2] sm:$0xff] %vm215, 0.0
          %217 = vst.msk [vmem:[#allocation2 + $0x8] sm:$0xff] %vm215, 0.0
          %218 = vst.msk [vmem:[#allocation2 + $0x10] sm:$0xff] %vm215, 0.0
          %219 = vst.msk [vmem:[#allocation2 + $0x18] sm:$0xff] %vm215, 0.0
        $region36: #{tpu_custom_call.1} parent=27 // pred_fallthru
          _
        // Predicated region
        $region37: #{tpu_custom_call.1} parent=27 // pred_check
          %p220 = pneg %p209
        $region38: #{tpu_custom_call.1} parent=27 // pred_check_branch
          %222 = sbr.rel (%p220) target = $region40
        $region39: #{tpu_custom_call.1} parent=27 // pred_region
          %v223 = vld [vmem:[%s179] sm:$0xff]
          %v224 = vld [vmem:[%s179 + $0x8] sm:$0xff]
          %v225 = vld [vmem:[%s179 + $0x10] sm:$0xff]
          %v226 = vld [vmem:[%s179 + $0x18] sm:$0xff]
          %v227 = vld [vmem:[%s179 + $0x20] sm:$0xff]
          %v228 = vld [vmem:[%s179 + $0x28] sm:$0xff]
          %v229 = vld [vmem:[%s179 + $0x30] sm:$0xff]
          %v230 = vld [vmem:[%s179 + $0x38] sm:$0xff]
          %s231 = smul.u32 %s27, 8
          %s232 = smul.addr %s231, 8
          %s233 = scalar_lea.vmem [#allocation5], %s232
          %234 = vst [vmem:[%s233] sm:$0xff] %v223
          %235 = vst [vmem:[%s233 + $0x8] sm:$0xff] %v224
          %236 = vst [vmem:[%s233 + $0x10] sm:$0xff] %v225
          %237 = vst [vmem:[%s233 + $0x18] sm:$0xff] %v226
          %238 = vst [vmem:[%s233 + $0x20] sm:$0xff] %v227
          %239 = vst [vmem:[%s233 + $0x28] sm:$0xff] %v228
          %240 = vst [vmem:[%s233 + $0x30] sm:$0xff] %v229
          %241 = vst [vmem:[%s233 + $0x38] sm:$0xff] %v230
          %v242 = vld [vmem:[#allocation2] sm:$0xff]
          %v243 = vld [vmem:[#allocation2 + $0x8] sm:$0xff]
          %244 = vmatprep.subr.mxu0 0.0
          %245 = vmatpush1.xpose.msra.mxu0 0.0
          %246 = vmatprep.subr.mxu0 0.0
          %247 = vmatpush1.xpose.msra.mxu0 0.0
          %248 = vmatprep.subr.mxu0 0.0
          %249 = vmatpush1.xpose.msra.mxu0 0.0
          %250 = vmatprep.subr.mxu0 0.0
          %251 = vmatpush1.xpose.msra.mxu0 0.0
          %252 = vmatprep.subr.mxu0 0.0
          %253 = vmatpush1.xpose.msra.mxu0 0.0
          %254 = vmatprep.subr.mxu0 0.0
          %255 = vmatpush1.xpose.msra.mxu0 0.0
          %256 = vmatprep.subr.mxu0 0.0
          %257 = vmatpush1.xpose.msra.mxu0 0.0
          %258 = vmatprep.subr.mxu0 0.0
          %259 = vmatpush1.xpose.msra.mxu0 0.0
          %260 = vmatprep.subr.mxu0 0.0
          %261 = vmatpush1.xpose.msra.mxu0 0.0
          %262 = vmatprep.subr.mxu0 0.0
          %263 = vmatpush1.xpose.msra.mxu0 0.0
          %264 = vmatprep.subr.mxu0 0.0
          %265 = vmatpush1.xpose.msra.mxu0 0.0
          %266 = vmatprep.subr.mxu0 0.0
          %267 = vmatpush1.xpose.msra.mxu0 0.0
          %268 = vmatprep.subr.mxu0 0.0
          %269 = vmatpush1.xpose.msra.mxu0 0.0
          %270 = vmatprep.subr.mxu0 0.0
          %271 = vmatpush1.xpose.msra.mxu0 0.0
          %272 = vmatprep.subr.mxu0 %v226
          %273 = vmatpush1.xpose.msra.mxu0 %v225
          %274 = vmatprep.subr.mxu0 %v224
          %275 = vmatpush1.xpose.msra.mxu0 %v223
          %276 = vmatprep.subr.mxu0 0.0
          %277 = vmatpush2.xpose.msra.mxu0 0.0
          %278 = vmatprep.subr.mxu0 0.0
          %279 = vmatpush2.xpose.msra.mxu0 0.0
          %280 = vmatprep.subr.mxu0 0.0
          %281 = vmatpush2.xpose.msra.mxu0 0.0
          %282 = vmatprep.subr.mxu0 0.0
          %283 = vmatpush2.xpose.msra.mxu0 0.0
          %284 = vmatprep.subr.mxu0 0.0
          %285 = vmatpush2.xpose.msra.mxu0 0.0
          %286 = vmatprep.subr.mxu0 0.0
          %287 = vmatpush2.xpose.msra.mxu0 0.0
          %288 = vmatprep.subr.mxu0 0.0
          %289 = vmatpush2.xpose.msra.mxu0 0.0
          %290 = vmatprep.subr.mxu0 0.0
          %291 = vmatpush2.xpose.msra.mxu0 0.0
          %292 = vmatprep.subr.mxu0 0.0
          %293 = vmatpush2.xpose.msra.mxu0 0.0
          %294 = vmatprep.subr.mxu0 0.0
          %295 = vmatpush2.xpose.msra.mxu0 0.0
          %296 = vmatprep.subr.mxu0 0.0
          %297 = vmatpush2.xpose.msra.mxu0 0.0
          %298 = vmatprep.subr.mxu0 0.0
          %299 = vmatpush2.xpose.msra.mxu0 0.0
          %300 = vmatprep.subr.mxu0 0.0
          %301 = vmatpush2.xpose.msra.mxu0 0.0
          %302 = vmatprep.subr.mxu0 0.0
          %303 = vmatpush2.xpose.msra.mxu0 0.0
          %304 = vmatprep.subr.mxu0 0.0
          %305 = vmatpush2.xpose.msra.mxu0 0.0
          %306 = vmatprep.subr.mxu0 0.0
          %307 = vmatpush2.xpose.msra.mxu0 0.0
          %308 = vmatprep.mubr.f32.mxu0 %v224
          %309 = vmatmul.mubr.f32.gmra.mxu0 %v223
          %v310 = vpop.f32.mrf.mxu0
          %v311 = vadd.f32 0.0, %v310
          %v312 = vpop.f32.mrf.mxu0
          %313 = vmatprep.mubr.f32.mxu0 %v226
          %314 = vmatmul.mubr.f32.gmra.mxu0 %v225
          %v315 = vpop.f32.mrf.mxu0
          %v316 = vadd.f32 0.0, %v315
          %v317 = vpop.f32.mrf.mxu0
          %318 = vdwg.mxu0
          %v319 = vadd.f32 %v242, %v311
          %v320 = vadd.f32 %v243, %v316
          %vm321 = vcmask 130048
          %322 = vst.msk [vmem:[#allocation2] sm:$0xff] %vm321, %v319
          %323 = vst.msk [vmem:[#allocation2 + $0x8] sm:$0xff] %vm321, %v320
          %s324 = scalar_lea.vmem [#allocation2], 16
          %v325 = vld [vmem:[%s324] sm:$0xff]
          %v326 = vld [vmem:[%s324 + $0x8] sm:$0xff]
          %327 = vmatprep.subr.mxu0 0.0
          %328 = vmatpush1.xpose.msra.mxu0 0.0
          %329 = vmatprep.subr.mxu0 0.0
          %330 = vmatpush1.xpose.msra.mxu0 0.0
          %331 = vmatprep.subr.mxu0 0.0
          %332 = vmatpush1.xpose.msra.mxu0 0.0
          %333 = vmatprep.subr.mxu0 0.0
          %334 = vmatpush1.xpose.msra.mxu0 0.0
          %335 = vmatprep.subr.mxu0 0.0
          %336 = vmatpush1.xpose.msra.mxu0 0.0
          %337 = vmatprep.subr.mxu0 0.0
          %338 = vmatpush1.xpose.msra.mxu0 0.0
          %339 = vmatprep.subr.mxu0 0.0
          %340 = vmatpush1.xpose.msra.mxu0 0.0
          %341 = vmatprep.subr.mxu0 0.0
          %342 = vmatpush1.xpose.msra.mxu0 0.0
          %343 = vmatprep.subr.mxu0 0.0
          %344 = vmatpush1.xpose.msra.mxu0 0.0
          %345 = vmatprep.subr.mxu0 0.0
          %346 = vmatpush1.xpose.msra.mxu0 0.0
          %347 = vmatprep.subr.mxu0 0.0
          %348 = vmatpush1.xpose.msra.mxu0 0.0
          %349 = vmatprep.subr.mxu0 0.0
          %350 = vmatpush1.xpose.msra.mxu0 0.0
          %351 = vmatprep.subr.mxu0 0.0
          %352 = vmatpush1.xpose.msra.mxu0 0.0
          %353 = vmatprep.subr.mxu0 0.0
          %354 = vmatpush1.xpose.msra.mxu0 0.0
          %355 = vmatprep.subr.mxu0 %v230
          %356 = vmatpush1.xpose.msra.mxu0 %v229
          %357 = vmatprep.subr.mxu0 %v228
          %358 = vmatpush1.xpose.msra.mxu0 %v227
          %359 = vmatprep.subr.mxu0 0.0
          %360 = vmatpush2.xpose.msra.mxu0 0.0
          %361 = vmatprep.subr.mxu0 0.0
          %362 = vmatpush2.xpose.msra.mxu0 0.0
          %363 = vmatprep.subr.mxu0 0.0
          %364 = vmatpush2.xpose.msra.mxu0 0.0
          %365 = vmatprep.subr.mxu0 0.0
          %366 = vmatpush2.xpose.msra.mxu0 0.0
          %367 = vmatprep.subr.mxu0 0.0
          %368 = vmatpush2.xpose.msra.mxu0 0.0
          %369 = vmatprep.subr.mxu0 0.0
          %370 = vmatpush2.xpose.msra.mxu0 0.0
          %371 = vmatprep.subr.mxu0 0.0
          %372 = vmatpush2.xpose.msra.mxu0 0.0
          %373 = vmatprep.subr.mxu0 0.0
          %374 = vmatpush2.xpose.msra.mxu0 0.0
          %375 = vmatprep.subr.mxu0 0.0
          %376 = vmatpush2.xpose.msra.mxu0 0.0
          %377 = vmatprep.subr.mxu0 0.0
          %378 = vmatpush2.xpose.msra.mxu0 0.0
          %379 = vmatprep.subr.mxu0 0.0
          %380 = vmatpush2.xpose.msra.mxu0 0.0
          %381 = vmatprep.subr.mxu0 0.0
          %382 = vmatpush2.xpose.msra.mxu0 0.0
          %383 = vmatprep.subr.mxu0 0.0
          %384 = vmatpush2.xpose.msra.mxu0 0.0
          %385 = vmatprep.subr.mxu0 0.0
          %386 = vmatpush2.xpose.msra.mxu0 0.0
          %387 = vmatprep.subr.mxu0 0.0
          %388 = vmatpush2.xpose.msra.mxu0 0.0
          %389 = vmatprep.subr.mxu0 0.0
          %390 = vmatpush2.xpose.msra.mxu0 0.0
          %391 = vmatprep.mubr.f32.mxu0 %v228
          %392 = vmatmul.mubr.f32.gmra.mxu0 %v227
          %v393 = vpop.f32.mrf.mxu0
          %v394 = vadd.f32 0.0, %v393
          %v395 = vpop.f32.mrf.mxu0
          %396 = vmatprep.mubr.f32.mxu0 %v230
          %397 = vmatmul.mubr.f32.gmra.mxu0 %v229
          %v398 = vpop.f32.mrf.mxu0
          %v399 = vadd.f32 0.0, %v398
          %v400 = vpop.f32.mrf.mxu0
          %401 = vdwg.mxu0
          %v402 = vadd.f32 %v325, %v394
          %v403 = vadd.f32 %v326, %v399
          %404 = vst.msk [vmem:[%s324] sm:$0xff] %vm321, %v402
          %405 = vst.msk [vmem:[%s324 + $0x8] sm:$0xff] %vm321, %v403
        $region40: #{tpu_custom_call.1} parent=27 // pred_fallthru
          _
        // Predicated region
        $region41: #{tpu_custom_call.1} parent=27 // pred_check
          _
        $region42: #{tpu_custom_call.1} parent=27 // pred_check_branch
          %407 = sbr.rel (%p211) target = $region44
        $region43: #{tpu_custom_call.1} parent=27 // pred_region
          %v408 = vlaneseq
          %v409 = vand.u32 %v408, 127
          %vm410 = vcmp.lt.s32.totalorder %v409, 4
          %v411 = vld [vmem:[#allocation2] sm:$0xff]
          %v412 = vld [vmem:[#allocation2 + $0x8] sm:$0xff]
          %v413 = vsel %vm410, %v411, inf
          %v414 = vsel %vm410, %v412, inf
          %vm415 = vcmask 130048
          %v416 = vsel %vm415, %v413, inf
          %417 = vmin.xlane.f32.xlu0 %v416
          %v418 = vpop.xlane.xlu0 %417
          %v419 = vsel %vm415, %v414, inf
          %420 = vmin.xlane.f32.xlu0 %v419
          %v421 = vpop.xlane.xlu0 %420
          %v422 = vsub.f32 %v418, %v411
          %v423 = vsub.f32 %v421, %v412
          %v424 = vsel %vm410, %v422, -inf
          %v425 = vsel %vm410, %v423, -inf
          %v426 = vmul.f32 %v424, 1.442695
          %v427 = vpow.pop %v426
          %v428 = vmul.f32 %v425, 1.442695
          %v429 = vpow.pop %v428
          %v430 = vsel %vm415, %v427, 0.0
          %431 = vadd.xlane.f32.xlu0 %v430
          %v432 = vpop.xlane.xlu0 %431
          %v433 = vsel %vm415, %v429, 0.0
          %434 = vadd.xlane.f32.xlu0 %v433
          %v435 = vpop.xlane.xlu0 %434
          %s436 = sld [smem:[#allocation6]]
          %v437 = vrcp.pop %v432
          %v438 = vrcp.pop %v435
          %v439 = vstv %s436
          %v440 = vmul.f32 %v439, %v437
          %v441 = vmul.f32 %v439, %v438
          %vm442 = vcmask 7168
          %443 = vst.msk [vmem:[#allocation4] sm:$0xff] %vm442, %v440
          %444 = vst.msk [vmem:[#allocation4 + $0x8] sm:$0xff] %vm442, %v441
          %v445 = vpack.c.bf16 %v429, %v427
          %v447 = vunpack.c.l.b16 %v445
          %v448 = vunpack.c.h.b16 %v445
          %v449 = vpack.c.b16 %v447, %v447
          %v450 = vpack.c.b16 %v448, %v448
          %vm453 = vcmask 125952
          %454 = vst.msk [vmem:[#allocation3] sm:$0xf] %vm453, %v449
          %455 = vst.msk [vmem:[#allocation3 + $0x4] sm:$0xf] %vm453, %v450
          %s456 = scalar_lea.vmem [#allocation2], 16
          %v457 = vld [vmem:[%s456] sm:$0xff]
          %v458 = vld [vmem:[%s456 + $0x8] sm:$0xff]
          %v459 = vsel %vm410, %v457, inf
          %v460 = vsel %vm410, %v458, inf
          %v461 = vsel %vm415, %v459, inf
          %462 = vmin.xlane.f32.xlu0 %v461
          %v463 = vpop.xlane.xlu0 %462
          %v464 = vsel %vm415, %v460, inf
          %465 = vmin.xlane.f32.xlu0 %v464
          %v466 = vpop.xlane.xlu0 %465
          %v467 = vsub.f32 %v463, %v457
          %v468 = vsub.f32 %v466, %v458
          %v469 = vsel %vm410, %v467, -inf
          %v470 = vsel %vm410, %v468, -inf
          %v471 = vmul.f32 %v469, 1.442695
          %v472 = vpow.pop %v471
          %v473 = vmul.f32 %v470, 1.442695
          %v474 = vpow.pop %v473
          %v475 = vsel %vm415, %v472, 0.0
          %476 = vadd.xlane.f32.xlu0 %v475
          %v477 = vpop.xlane.xlu0 %476
          %v478 = vsel %vm415, %v474, 0.0
          %479 = vadd.xlane.f32.xlu0 %v478
          %v480 = vpop.xlane.xlu0 %479
          %s481 = sld [smem:[#allocation6]]
          %v482 = vrcp.pop %v477
          %v483 = vrcp.pop %v480
          %v484 = vstv %s481
          %v485 = vmul.f32 %v484, %v482
          %v486 = vmul.f32 %v484, %v483
          %s487 = scalar_lea.vmem [#allocation4], 16
          %488 = vst.msk [vmem:[%s487] sm:$0xff] %vm442, %v485
          %489 = vst.msk [vmem:[%s487 + $0x8] sm:$0xff] %vm442, %v486
          %v490 = vpack.c.bf16 %v474, %v472
          %v492 = vunpack.c.l.b16 %v490
          %v493 = vunpack.c.h.b16 %v490
          %v494 = vpack.c.b16 %v492, %v492
          %v495 = vpack.c.b16 %v493, %v493
          %s498 = scalar_lea.vmem [#allocation3], 8
          %499 = vst.msk [vmem:[%s498] sm:$0xf] %vm453, %v494
          %500 = vst.msk [vmem:[%s498 + $0x4] sm:$0xf] %vm453, %v495
        $region44: #{tpu_custom_call.1} parent=27 // pred_fallthru
          _
        %p501 = scmp.eq.s32.totalorder %s26, 1
        // Predicated region
        $region45: #{tpu_custom_call.1} parent=27 // pred_check
          %p502 = pneg %p501
        $region46: #{tpu_custom_call.1} parent=27 // pred_check_branch
          %504 = sbr.rel (%p502) target = $region48
        $region47: #{tpu_custom_call.1} parent=27 // pred_region
          %s505 = smul.u32 %s27, 8
          %s506 = smul.addr %s505, 8
          %s507 = scalar_lea.vmem [#allocation5], %s506
          %v508 = vld [vmem:[%s507] sm:$0xff]
          %v509 = vld [vmem:[%s507 + $0x8] sm:$0xff]
          %v510 = vld [vmem:[%s507 + $0x10] sm:$0xff]
          %v511 = vld [vmem:[%s507 + $0x18] sm:$0xff]
          %v512 = vld [vmem:[%s507 + $0x20] sm:$0xff]
          %v513 = vld [vmem:[%s507 + $0x28] sm:$0xff]
          %v514 = vld [vmem:[%s507 + $0x30] sm:$0xff]
          %v515 = vld [vmem:[%s507 + $0x38] sm:$0xff]
          %v516 = vld [vmem:[#allocation3] sm:$0xf]
          %v517 = vld [vmem:[#allocation3 + $0x4] sm:$0xf]
          %v518 = vpack.c.bf16 %v510, %v508
          %v519 = vpack.c.bf16 %v511, %v509
          %v522 = vunpack.c.l.b16 %v516
          %v523 = vunpack.c.l.b16 %v517
          %v524 = vpack.c.b16 %v523, %v522
          %vm525 = vcmask 130048
          %v527 = vsel %vm525, %v524, 0
          %529 = vmatprep.subr.bf16.mxu0 0
          %530 = vmatpush1.bf16.msra.mxu0 0
          %531 = vmatprep.subr.bf16.mxu0 0
          %532 = vmatpush1.bf16.msra.mxu0 0
          %533 = vmatprep.subr.bf16.mxu0 0
          %534 = vmatpush1.bf16.msra.mxu0 0
          %535 = vmatprep.subr.bf16.mxu0 0
          %536 = vmatpush1.bf16.msra.mxu0 0
          %537 = vmatprep.subr.bf16.mxu0 0
          %538 = vmatpush1.bf16.msra.mxu0 0
          %539 = vmatprep.subr.bf16.mxu0 0
          %540 = vmatpush1.bf16.msra.mxu0 0
          %541 = vmatprep.subr.bf16.mxu0 0
          %542 = vmatpush1.bf16.msra.mxu0 0
          %543 = vmatprep.subr.bf16.mxu0 %v519
          %544 = vmatpush1.bf16.msra.mxu0 %v518
          %545 = vmatprep.subr.bf16.mxu0 0
          %546 = vmatpush2.bf16.msra.mxu0 0
          %547 = vmatprep.subr.bf16.mxu0 0
          %548 = vmatpush2.bf16.msra.mxu0 0
          %549 = vmatprep.subr.bf16.mxu0 0
          %550 = vmatpush2.bf16.msra.mxu0 0
          %551 = vmatprep.subr.bf16.mxu0 0
          %552 = vmatpush2.bf16.msra.mxu0 0
          %553 = vmatprep.subr.bf16.mxu0 0
          %554 = vmatpush2.bf16.msra.mxu0 0
          %555 = vmatprep.subr.bf16.mxu0 0
          %556 = vmatpush2.bf16.msra.mxu0 0
          %557 = vmatprep.subr.bf16.mxu0 0
          %558 = vmatpush2.bf16.msra.mxu0 0
          %559 = vmatprep.subr.bf16.mxu0 0
          %560 = vmatpush2.bf16.msra.mxu0 0
          %561 = vmatprep.mubr.bf16.mxu0 0
          %562 = vmatmul.mubr.bf16.gmra.mxu0 %v527
          %v563 = vpop.f32.mrf.mxu0
          %v564 = vadd.f32 0.0, %v563
          %v565 = vpop.f32.mrf.mxu0
          %v566 = vadd.f32 0.0, %v565
          %v567 = vpop.f32.mrf.mxu0
          %v568 = vadd.f32 0.0, %v567
          %v569 = vpop.f32.mrf.mxu0
          %v570 = vadd.f32 0.0, %v569
          %571 = vdwg.mxu0
          %v572 = vld [vmem:[#allocation4] sm:$0xff]
          %v573 = vld [vmem:[#allocation4 + $0x8] sm:$0xff]
          %575 = vset.pattern.permute.xlu0 0
          %576 = vperm.xlu0 %575, %v572
          %v577 = vpop.permute.xlu0 %576
          %580 = vset.pattern.permute.xlu0 0
          %581 = vperm.xlu0 %580, %v573
          %v582 = vpop.permute.xlu0 %581
          %v584 = vmul.f32 %v564, %v577
          %v585 = vmul.f32 %v566, %v577
          %v586 = vmul.f32 %v568, %v582
          %v587 = vmul.f32 %v570, %v582
          %v588 = vadd.f32 %v584, %v508
          %v589 = vadd.f32 %v585, %v509
          %v590 = vadd.f32 %v586, %v510
          %v591 = vadd.f32 %v587, %v511
          %592 = vst [vmem:[%s199] sm:$0xff] %v588
          %593 = vst [vmem:[%s199 + $0x8] sm:$0xff] %v589
          %594 = vst [vmem:[%s199 + $0x10] sm:$0xff] %v590
          %595 = vst [vmem:[%s199 + $0x18] sm:$0xff] %v591
          %s596 = scalar_lea.vmem [#allocation3], 8
          %v597 = vld [vmem:[%s596] sm:$0xf]
          %v598 = vld [vmem:[%s596 + $0x4] sm:$0xf]
          %v599 = vpack.c.bf16 %v514, %v512
          %v600 = vpack.c.bf16 %v515, %v513
          %v603 = vunpack.c.l.b16 %v597
          %v604 = vunpack.c.l.b16 %v598
          %v605 = vpack.c.b16 %v604, %v603
          %v607 = vsel %vm525, %v605, 0
          %609 = vmatprep.subr.bf16.mxu0 0
          %610 = vmatpush1.bf16.msra.mxu0 0
          %611 = vmatprep.subr.bf16.mxu0 0
          %612 = vmatpush1.bf16.msra.mxu0 0
          %613 = vmatprep.subr.bf16.mxu0 0
          %614 = vmatpush1.bf16.msra.mxu0 0
          %615 = vmatprep.subr.bf16.mxu0 0
          %616 = vmatpush1.bf16.msra.mxu0 0
          %617 = vmatprep.subr.bf16.mxu0 0
          %618 = vmatpush1.bf16.msra.mxu0 0
          %619 = vmatprep.subr.bf16.mxu0 0
          %620 = vmatpush1.bf16.msra.mxu0 0
          %621 = vmatprep.subr.bf16.mxu0 0
          %622 = vmatpush1.bf16.msra.mxu0 0
          %623 = vmatprep.subr.bf16.mxu0 %v600
          %624 = vmatpush1.bf16.msra.mxu0 %v599
          %625 = vmatprep.subr.bf16.mxu0 0
          %626 = vmatpush2.bf16.msra.mxu0 0
          %627 = vmatprep.subr.bf16.mxu0 0
          %628 = vmatpush2.bf16.msra.mxu0 0
          %629 = vmatprep.subr.bf16.mxu0 0
          %630 = vmatpush2.bf16.msra.mxu0 0
          %631 = vmatprep.subr.bf16.mxu0 0
          %632 = vmatpush2.bf16.msra.mxu0 0
          %633 = vmatprep.subr.bf16.mxu0 0
          %634 = vmatpush2.bf16.msra.mxu0 0
          %635 = vmatprep.subr.bf16.mxu0 0
          %636 = vmatpush2.bf16.msra.mxu0 0
          %637 = vmatprep.subr.bf16.mxu0 0
          %638 = vmatpush2.bf16.msra.mxu0 0
          %639 = vmatprep.subr.bf16.mxu0 0
          %640 = vmatpush2.bf16.msra.mxu0 0
          %641 = vmatprep.mubr.bf16.mxu0 0
          %642 = vmatmul.mubr.bf16.gmra.mxu0 %v607
          %v643 = vpop.f32.mrf.mxu0
          %v644 = vadd.f32 0.0, %v643
          %v645 = vpop.f32.mrf.mxu0
          %v646 = vadd.f32 0.0, %v645
          %v647 = vpop.f32.mrf.mxu0
          %v648 = vadd.f32 0.0, %v647
          %v649 = vpop.f32.mrf.mxu0
          %v650 = vadd.f32 0.0, %v649
          %651 = vdwg.mxu0
          %s652 = scalar_lea.vmem [#allocation4], 16
          %v653 = vld [vmem:[%s652] sm:$0xff]
          %v654 = vld [vmem:[%s652 + $0x8] sm:$0xff]
          %656 = vset.pattern.permute.xlu0 0
          %657 = vperm.xlu0 %656, %v653
          %v658 = vpop.permute.xlu0 %657
          %661 = vset.pattern.permute.xlu0 0
          %662 = vperm.xlu0 %661, %v654
          %v663 = vpop.permute.xlu0 %662
          %v665 = vmul.f32 %v644, %v658
          %v666 = vmul.f32 %v646, %v658
          %v667 = vmul.f32 %v648, %v663
          %v668 = vmul.f32 %v650, %v663
          %v669 = vadd.f32 %v665, %v512
          %v670 = vadd.f32 %v666, %v513
          %v671 = vadd.f32 %v667, %v514
          %v672 = vadd.f32 %v668, %v515
          %s673 = scalar_lea.vmem %s199, 32 [#allocation10]
          %674 = vst [vmem:[%s673] sm:$0xff] %v669
          %675 = vst [vmem:[%s673 + $0x8] sm:$0xff] %v670
          %676 = vst [vmem:[%s673 + $0x10] sm:$0xff] %v671
          %677 = vst [vmem:[%s673 + $0x18] sm:$0xff] %v672
        $region48: #{tpu_custom_call.1} parent=27 // pred_fallthru
          _
        %s678 = sand.u32 %s106, 1
        %s679 = scalar_lea.sflag [#allocation9], %s678
        %s680 = sand.u32 %s106, 1
        %s681 = smul.addr %s680, 64
        %s682 = scalar_lea.vmem [#allocation10], %s681
        // Predicated region
        $region49: #{tpu_custom_call.1} parent=27 // pred_check
          %p683 = pneg %p116
        $region50: #{tpu_custom_call.1} parent=27 // pred_check_branch
          %685 = sbr.rel (%p683) target = $region52
        $region51: #{tpu_custom_call.1} parent=27 // pred_region
          %s686 = smul.u32 %s27, %s26
          %s687 = smul.u32 2, %s25
          %s688 = smul.u32 2, %s686
          %s690 = ssub.s32 1024, 1024
          %691 = vsyncadd %s679, %s690
          %s692 = smul.addr %s687, 4
          %s693 = sadd.s32 %s688, %s692
          %s694 = smul.addr %s693, 128
          %s695 = scalar_lea.hbm %s2, %s694
          %s696 = sshll.u32 %s682, 4
          %s697 = int_to_ptr.vmem [resolvable:$true] %s696
          %702 = dma.vmem_to_hbm [thread:$0]  %s697, 1024, %s695, %s679, 256, 256, 16
        $region52: #{tpu_custom_call.1} parent=27 // pred_fallthru
          _
      $region28: #{tpu_custom_call.1} parent=5 // pred_fallthru
        _
      %p703 = scmp.le.s32.totalorder 2, %s15
      // Predicated region
      $region53: #{tpu_custom_call.1} parent=5 // pred_check
        %p704 = pneg %p703
      $region54: #{tpu_custom_call.1} parent=5 // pred_check_branch
        %706 = sbr.rel (%p704) target = $region56
      $region55: #{tpu_custom_call.1} parent=5 // pred_region
        %s707 = ssub.s32 %s15, 2
        // Predicated region
        $region57: #{tpu_custom_call.1} parent=55 // pred_check
          %p708 = pneg %p122
        $region58: #{tpu_custom_call.1} parent=55 // pred_check_branch
          %710 = sbr.rel (%p708) target = $region60
        $region59: #{tpu_custom_call.1} parent=55 // pred_region
          %s711 = sand.u32 %s107, 1
          %s712 = scalar_lea.sflag [#allocation9], %s711
          %s713 = sand.u32 %s107, 1
          %s714 = smul.addr %s713, 64
          %s715 = scalar_lea.vmem [#allocation10], %s714
          %716 = dma.done %s712, 1024
        $region60: #{tpu_custom_call.1} parent=55 // pred_fallthru
          _
      $region56: #{tpu_custom_call.1} parent=5 // pred_fallthru
        _
    $region6: #{tpu_custom_call.1} parent=1 // loop_footer
      %s19 = sadd.s32 1, %s15
    $region7: #{tpu_custom_call.1} parent=1 // loop_footer_branch
      %14 = sbr.rel target = $region3
    $region8: #{tpu_custom_call.1} parent=1 // loop_exit
      _
    %717 = vsyncpa [#allocation8], 1
    %s718 = scalar_lea.sflag [#allocation8], 1
    %719 = vsyncpa %s718, 1
    %720 = vsyncpa [#allocation9], 1
    %s721 = scalar_lea.sflag [#allocation9], 1
    %722 = vsyncpa %s721, 1

</llo_original>
